<compile_context>
chip_gen: v5e
topology: v5e:2x2
jax: 0.10.0
libtpu: 0.0.40
codegen_flags: <defaults>
</compile_context>

<pallas_src>
import jax
import jax.numpy as jnp
from jax.experimental import pallas as pl
from jax.experimental.pallas import tpu as pltpu


def _make_kernel(embed_dim):
    def kernel(patches_ref, w_ref, posc_ref, out_ref, acc_ref):
        # patches_ref: (1, NP, K)    bf16  one image's flattened patches
        # w_ref:       (K, D)        bf16  flattened conv weight (resident)
        # posc_ref:    (NP+1, D)     bf16  pos table, row 0 == pos[0] + cls (resident)
        # out_ref:     (1, NP+1, D)  output dtype
        # acc_ref:     (NP+1, D)     f32 VMEM scratch
        #
        # Patch-embedding matmul lands at row offset 1 of the f32 scratch; row 0
        # is zeroed, so after adding the (cls-folded) position table, row 0 of
        # the output is cls + pos[0] and rows 1.. are patch_embeds + pos[1:].
        acc_ref[0:1, :] = jnp.zeros((1, embed_dim), jnp.float32)
        acc_ref[1:, :] = jnp.dot(patches_ref[0], w_ref[...],
                                 preferred_element_type=jnp.float32)
        out_ref[0] = (acc_ref[...] + posc_ref[...].astype(jnp.float32)
                      ).astype(out_ref.dtype)
    return kernel


def clip_vision_embeddings(pixel_values, conv_weight, pos_embedding, cls_embedding,
                           patch_size, *, out_dtype=jnp.bfloat16):
    """pixel_values: (B, C, H, W) float32 (NCHW, like PyTorch).
       conv_weight:  (D, C, P, P) (PyTorch Conv2d weight layout, bias=False).
       pos_embedding:(NP+1, D)
       cls_embedding:(1, 1, D)
       Returns (B, NP+1, D) in `out_dtype` (bf16 by default; the op is
       HBM-bound, so the narrow output halves the dominant write stream)."""
    B, C, H, W = pixel_values.shape
    D = conv_weight.shape[0]
    P = patch_size
    if H % P or W % P:
        raise ValueError(f"image size ({H},{W}) not divisible by patch size {P}")
    nph, npw = H // P, W // P
    NP = nph * npw
    K = C * P * P
    if pos_embedding.shape != (NP + 1, D):
        raise ValueError(
            f"position embedding {pos_embedding.shape} != ({NP + 1}, {D}); "
            "no position-embedding interpolation path is implemented")

    # --- im2col glue: cast to bf16 BEFORE the transpose so the one materialized
    # copy of the patches is half-width; no K/NP padding copies (full-dim blocks
    # in the kernel instead).
    # TODO(synk): NHWC pixel input upstream would make this a pure reshape.
    px = pixel_values.astype(jnp.bfloat16)
    patches = px.reshape(B, C, nph, P, npw, P)
    patches = patches.transpose(0, 2, 4, 1, 3, 5).reshape(B, NP, K)

    w_flat = jnp.transpose(conv_weight.reshape(D, K)).astype(jnp.bfloat16)   # (K, D)

    # Position table with CLS folded into row 0 (tiny), kept in bf16 to halve
    # its DMA / resident VMEM; upcast to f32 inside the kernel when adding.
    posc = pos_embedding.astype(jnp.float32)
    posc = posc.at[0].add(cls_embedding.reshape(D).astype(jnp.float32))
    posc = posc.astype(jnp.bfloat16)                                          # (NP+1, D)

    out = pl.pallas_call(
        _make_kernel(D),
        out_shape=jax.ShapeDtypeStruct((B, NP + 1, D), out_dtype),
        grid_spec=pltpu.PrefetchScalarGridSpec(
            num_scalar_prefetch=0,
            grid=(B,),
            in_specs=[
                pl.BlockSpec((1, NP, K), lambda b: (b, 0, 0)),     # streams per image
                pl.BlockSpec((K, D), lambda b: (0, 0)),            # weight: resident
                pl.BlockSpec((NP + 1, D), lambda b: (0, 0)),       # pos+cls: resident
            ],
            out_specs=pl.BlockSpec((1, NP + 1, D), lambda b: (b, 0, 0)),
            scratch_shapes=[pltpu.VMEM((NP + 1, D), jnp.float32)],
        ),
        compiler_params=pltpu.CompilerParams(
            dimension_semantics=("parallel",)),   # megacore over images
    )(patches, w_flat, posc)

    # TODO(synk): dropout rate is 0.0 in the reference config -> identity; a
    # nonzero rate would need pltpu.prng_* masking here.
    return out


if __name__ == "__main__":
    # Small config: image 16x16, patch 4 -> 16 patches, 17 positions, D=128.
    B, C, IMG, P, D = 2, 3, 16, 4, 128
    NP = (IMG // P) ** 2
    NPOS = NP + 1

    key = jax.random.PRNGKey(0)
    k_px, k_w, k_pos, k_cls = jax.random.split(key, 4)

    pixel_values = jax.random.normal(k_px, (B, C, IMG, IMG), dtype=jnp.float32)
    conv_weight = jax.random.normal(k_w, (D, C, P, P), dtype=jnp.float32) * 0.02
    pos_embedding = jax.random.normal(k_pos, (NPOS, D), dtype=jnp.float32) * 0.02
    cls_embedding = jax.random.normal(k_cls, (1, 1, D), dtype=jnp.float32)

    out = clip_vision_embeddings(pixel_values, conv_weight, pos_embedding,
                                 cls_embedding, patch_size=P)
    out = jax.block_until_ready(out)

    # Pure-JAX f32 reference for sanity.
    patches_ref = pixel_values.reshape(B, C, IMG // P, P, IMG // P, P)
    patches_ref = patches_ref.transpose(0, 2, 4, 1, 3, 5).reshape(B, NP, C * P * P)
    patch_embeds_ref = patches_ref @ conv_weight.reshape(D, -1).T            # (B, NP, D)
    cls_ref = jnp.broadcast_to(cls_embedding, (B, 1, D))
    ref = jnp.concatenate([cls_ref, patch_embeds_ref], axis=1) + pos_embedding[None]

    assert out.shape == (B, NPOS, D)
    assert out.dtype == jnp.bfloat16
    # bf16 matmul inputs / pos table / output with f32 accumulation -> loose tol.
    assert jnp.allclose(out.astype(jnp.float32), ref, atol=2e-2, rtol=2e-2), (
        float(jnp.max(jnp.abs(out.astype(jnp.float32) - ref))))
    print("KERNEL_OK")
</pallas_src>

<mosaic_0001>
module attributes {stable_mosaic.version = 11 : i64} {
  func.func @kernel(%arg0: i32, %arg1: memref<1x16x48xbf16, #tpu.memory_space<vmem>>, %arg2: memref<48x128xbf16, #tpu.memory_space<vmem>>, %arg3: memref<17x128xbf16, #tpu.memory_space<vmem>>, %arg4: memref<1x17x128xbf16, #tpu.memory_space<vmem>>, %arg5: memref<17x128xf32, #tpu.memory_space<vmem>>) attributes {dimension_semantics = [#tpu.dimension_semantics<parallel>], iteration_bounds = array<i64: 2>, scalar_prefetch = 0 : i64, scratch_operands = 1 : i64, tpu.core_type = #tpu.core_type<tc>, window_params = [{transform_indices = @transform_0, window_bounds = array<i64: 1, 16, 48>}, {pipeline_mode = #tpu.pipeline_mode<synchronous>, transform_indices = @transform_1, window_bounds = array<i64: 48, 128>}, {pipeline_mode = #tpu.pipeline_mode<synchronous>, transform_indices = @transform_2, window_bounds = array<i64: 17, 128>}, {transform_indices = @transform_3, window_bounds = array<i64: 1, 17, 128>}]} {
    %cst = arith.constant 0.000000e+00 : f32
    %0 = vector.broadcast %cst : f32 to vector<1x128xf32>
    %c0 = arith.constant 0 : index
    %c0_0 = arith.constant 0 : index
    %1 = vector.load %arg5[%c0, %c0_0] : memref<17x128xf32, #tpu.memory_space<vmem>>, vector<1x128xf32>
    tpu.vector_store %arg5[%c0, %c0_0], %0 {strides = array<i32>} : memref<17x128xf32, #tpu.memory_space<vmem>>, vector<1x128xf32>,
    %c0_1 = arith.constant 0 : index
    %c0_2 = arith.constant 0 : index
    %c0_3 = arith.constant 0 : index
    %2 = vector.load %arg1[%c0_1, %c0_2, %c0_3] : memref<1x16x48xbf16, #tpu.memory_space<vmem>>, vector<1x16x48xbf16>
    %3 = vector.shape_cast %2 : vector<1x16x48xbf16> to vector<16x48xbf16>
    %c0_4 = arith.constant 0 : index
    %c0_5 = arith.constant 0 : index
    %4 = vector.load %arg2[%c0_4, %c0_5] : memref<48x128xbf16, #tpu.memory_space<vmem>>, vector<48x128xbf16>
    %cst_6 = arith.constant dense<0.000000e+00> : vector<16x128xf32>
    %5 = tpu.matmul %3, %4, %cst_6 {dimension_numbers = #tpu.dot_dimension_numbers<[1], [0], [0], [1], [0, 0, 1, 1], [], []>} : vector<16x48xbf16>, vector<48x128xbf16>, vector<16x128xf32> -> vector<16x128xf32>
    %c1 = arith.constant 1 : index
    %c0_7 = arith.constant 0 : index
    %6 = vector.load %arg5[%c1, %c0_7] : memref<17x128xf32, #tpu.memory_space<vmem>>, vector<16x128xf32>
    tpu.vector_store %arg5[%c1, %c0_7], %5 {strides = array<i32>} : memref<17x128xf32, #tpu.memory_space<vmem>>, vector<16x128xf32>,
    %c0_8 = arith.constant 0 : index
    %c0_9 = arith.constant 0 : index
    %7 = vector.load %arg5[%c0_8, %c0_9] : memref<17x128xf32, #tpu.memory_space<vmem>>, vector<17x128xf32>
    %c0_10 = arith.constant 0 : index
    %c0_11 = arith.constant 0 : index
    %8 = vector.load %arg3[%c0_10, %c0_11] : memref<17x128xbf16, #tpu.memory_space<vmem>>, vector<17x128xbf16>
    %9 = arith.extf %8 : vector<17x128xbf16> to vector<17x128xf32>
    %10 = arith.addf %7, %9 : vector<17x128xf32>
    %11 = arith.truncf %10 : vector<17x128xf32> to vector<17x128xbf16>
    %c0_12 = arith.constant 0 : index
    %c0_13 = arith.constant 0 : index
    %c0_14 = arith.constant 0 : index
    %12 = vector.load %arg4[%c0_12, %c0_13, %c0_14] : memref<1x17x128xbf16, #tpu.memory_space<vmem>>, vector<1x17x128xbf16>
    %13 = vector.shape_cast %12 : vector<1x17x128xbf16> to vector<17x128xbf16>
    %14 = vector.shape_cast %11 : vector<17x128xbf16> to vector<1x17x128xbf16>
    tpu.vector_store %arg4[%c0_12, %c0_13, %c0_14], %14 {strides = array<i32>} : memref<1x17x128xbf16, #tpu.memory_space<vmem>>, vector<1x17x128xbf16>,
    return
  }
  func.func @transform_0(%arg0: i32) -> (i32, i32, i32) {
    %c0_i32 = arith.constant 0 : i32
    %c0_i32_0 = arith.constant 0 : i32
    %c0_i32_1 = arith.constant 0 : i32
    return %arg0, %c0_i32, %c0_i32_0 : i32, i32, i32
  }
  func.func @transform_1(%arg0: i32) -> (i32, i32) {
    %c0_i32 = arith.constant 0 : i32
    %c0_i32_0 = arith.constant 0 : i32
    %c0_i32_1 = arith.constant 0 : i32
    return %c0_i32, %c0_i32_0 : i32, i32
  }
  func.func @transform_2(%arg0: i32) -> (i32, i32) {
    %c0_i32 = arith.constant 0 : i32
    %c0_i32_0 = arith.constant 0 : i32
    %c0_i32_1 = arith.constant 0 : i32
    return %c0_i32, %c0_i32_0 : i32, i32
  }
  func.func @transform_3(%arg0: i32) -> (i32, i32, i32) {
    %c0_i32 = arith.constant 0 : i32
    %c0_i32_0 = arith.constant 0 : i32
    %c0_i32_1 = arith.constant 0 : i32
    return %arg0, %c0_i32, %c0_i32_0 : i32, i32, i32
  }
}

</mosaic_0001>

<llo_original>
// kernel: tpu_custom_call.1
$region0: #{tpu_custom_call.1}
  #allocation0 [shape = 'u32[]', space=smem, size = 0x4, offset = 0x4, fixed_abs, tag = 'smem constant byte address 0x4 - core index']
  #allocation1 [shape = 'u32[72,128]{1,0:T(1,128)}', space=vmem, size = 0x9000, scoped, tag = 'internal scratch']
  #allocation2 [shape = 'f32[17,128]{1,0:T(8,128)}', space=vmem, size = 0x3000, scoped, tag = 'scratch operand']
  %s0 = inlined_call_operand.hbm [shape: bf16[2,16,48], index: 0, kind: input, shape index: {}]
  %s1 = inlined_call_operand.hbm [shape: bf16[48,128], index: 1, kind: input, shape index: {}]
  %s2 = inlined_call_operand.hbm [shape: bf16[17,128], index: 2, kind: input, shape index: {}]
  %s3 = inlined_call_operand.vmem [shape: bf16[2,17,128], index: 3, kind: output, shape index: {}]
  %s4 = sld [smem:[#allocation0]]
  $region57: #{tpu_custom_call.1} parent=0
    _
  %s6 = ssub.s32 1, %s4
  %s7 = scalar_select 0, %s6, %s4
  $region1: #{tpu_custom_call.1} parent=0
    #allocation3 [shape = 'u8[8192]{0}', space=vmem, size = 0x2000, scoped, tag = 'input window, operand 0']
    #allocation4 [shape = 's32[2]{0}', space=sflag, size = 0x8, scoped, tag = 'scoped memory for tpu_custom_call.1']
    #allocation5 [shape = 'u8[12288]{0}', space=vmem, size = 0x3000, scoped, tag = 'input window, operand 1, single buffered']
    #allocation6 [shape = 's32[1]{0}', space=sflag, size = 0x4, scoped, tag = 'scoped memory for tpu_custom_call.1']
    #allocation7 [shape = 'u8[6144]{0}', space=vmem, size = 0x1800, scoped, tag = 'input window, operand 2, single buffered']
    %8 = vsyncpa [#allocation4], 0
    %s9 = scalar_lea.sflag [#allocation4], 1
    %10 = vsyncpa %s9, 0
    %11 = vsyncpa [#allocation6], 0
    loop: start=0, step=1, limit=4
    $region2: #{tpu_custom_call.1} parent=1 // loop_pre_header
      _
    $region3: #{tpu_custom_call.1} parent=1 // loop_header
      %s13 = sphi 0, %s17
      %p14 = scmp.ge.s32.totalorder %s13, 4
      %s23 = sphi 0, %s25
      %s26 = sphi 0, %s23
      %s27 = sphi 0, %s26
      %s43 = sphi 0, %s27
      %s47 = sphi 0, %s47
      %s49 = sphi 0, %s47
      %s50 = sphi 0, %s49
      %s64 = sphi 0, %s50
      %s68 = sphi 0, %s68
      %s70 = sphi 0, %s68
      %s71 = sphi 0, %s70
      %s85 = sphi 0, %s71
      %s91 = sphi 0, %s93
      %s94 = sphi 0, %s91
      %s95 = sphi 0, %s94
      %s111 = sphi 0, %s95
    $region4: #{tpu_custom_call.1} parent=1 // loop_header_branch
      %16 = sbr.rel (%p14) target = $region8
    $region5: #{tpu_custom_call.1} parent=1 // loop_body
      %s18 = ssub.s32 %s13, 1
      %s19 = ssub.s32 %s13, 2
      %s20 = sadd.s32 %s13, 1
      %s21 = ssub.s32 %s13, %s20
      %p22 = scmp.eq.s32.totalorder %s21, 0
      %s24 = sadd.s32 %s23, 1
      %s25 = scalar_select %p22, %s23, %s24
      %p28 = pneg %p22
      %p29 = scmp.eq.s32.totalorder %s13, 1
      %p30 = por %p28, %p29
      %p31 = scmp.ne.s32.totalorder %s23, %s26
      %p32 = scmp.eq.s32.totalorder %s13, 0
      %p33 = por %p31, %p32
      %p34 = scmp.ne.s32.totalorder %s23, %s26
      %p35 = scmp.eq.s32.totalorder %s18, 1
      %p36 = por %p34, %p35
      %p37 = scmp.ne.s32.totalorder %s26, %s27
      %p38 = scmp.eq.s32.totalorder %s18, 0
      %p39 = por %p37, %p38
      %p40 = scmp.ne.s32.totalorder %s26, %s27
      %p41 = scmp.eq.s32.totalorder %s19, 1
      %p42 = por %p40, %p41
      %p44 = scmp.ne.s32.totalorder %s27, %s43
      %p45 = scmp.eq.s32.totalorder %s19, 0
      %p46 = por %p44, %p45
      %s48 = sadd.s32 %s47, 1
      %p51 = scmp.eq.s32.totalorder %s13, 1
      %p52 = scmp.ne.s32.totalorder %s47, %s49
      %p53 = scmp.eq.s32.totalorder %s13, 0
      %p54 = por %p52, %p53
      %p55 = scmp.ne.s32.totalorder %s47, %s49
      %p56 = scmp.eq.s32.totalorder %s18, 1
      %p57 = por %p55, %p56
      %p58 = scmp.ne.s32.totalorder %s49, %s50
      %p59 = scmp.eq.s32.totalorder %s18, 0
      %p60 = por %p58, %p59
      %p61 = scmp.ne.s32.totalorder %s49, %s50
      %p62 = scmp.eq.s32.totalorder %s19, 1
      %p63 = por %p61, %p62
      %p65 = scmp.ne.s32.totalorder %s50, %s64
      %p66 = scmp.eq.s32.totalorder %s19, 0
      %p67 = por %p65, %p66
      %s69 = sadd.s32 %s68, 1
      %p72 = scmp.eq.s32.totalorder %s13, 1
      %p73 = scmp.ne.s32.totalorder %s68, %s70
      %p74 = scmp.eq.s32.totalorder %s13, 0
      %p75 = por %p73, %p74
      %p76 = scmp.ne.s32.totalorder %s68, %s70
      %p77 = scmp.eq.s32.totalorder %s18, 1
      %p78 = por %p76, %p77
      %p79 = scmp.ne.s32.totalorder %s70, %s71
      %p80 = scmp.eq.s32.totalorder %s18, 0
      %p81 = por %p79, %p80
      %p82 = scmp.ne.s32.totalorder %s70, %s71
      %p83 = scmp.eq.s32.totalorder %s19, 1
      %p84 = por %p82, %p83
      %p86 = scmp.ne.s32.totalorder %s71, %s85
      %p87 = scmp.eq.s32.totalorder %s19, 0
      %p88 = por %p86, %p87
      %s89 = ssub.s32 %s13, %s20
      %p90 = scmp.eq.s32.totalorder %s89, 0
      %s92 = sadd.s32 %s91, 1
      %s93 = scalar_select %p90, %s91, %s92
      %p96 = pneg %p90
      %p97 = scmp.eq.s32.totalorder %s13, 1
      %p98 = por %p96, %p97
      %p99 = scmp.ne.s32.totalorder %s91, %s94
      %p100 = scmp.eq.s32.totalorder %s13, 0
      %p101 = por %p99, %p100
      %p102 = scmp.ne.s32.totalorder %s91, %s94
      %p103 = scmp.eq.s32.totalorder %s18, 1
      %p104 = por %p102, %p103
      %p105 = scmp.ne.s32.totalorder %s94, %s95
      %p106 = scmp.eq.s32.totalorder %s18, 0
      %p107 = por %p105, %p106
      %p108 = scmp.ne.s32.totalorder %s94, %s95
      %p109 = scmp.eq.s32.totalorder %s19, 1
      %p110 = por %p108, %p109
      %p112 = scmp.ne.s32.totalorder %s95, %s111
      %p113 = scmp.eq.s32.totalorder %s19, 0
      %p114 = por %p112, %p113
      %p115 = scmp.le.s32.totalorder 1, %s13
      %p116 = scmp.lt.s32.totalorder %s13, 3
      %p117 = pnand %p115, %p116
      %p118 = pneg %p117
      // Predicated region
      $region9: #{tpu_custom_call.1} parent=5 // pred_check
        _
      $region10: #{tpu_custom_call.1} parent=5 // pred_check_branch
        %120 = sbr.rel (%p117) target = $region12
      $region11: #{tpu_custom_call.1} parent=5 // pred_region
        %s121 = ssub.s32 %s13, 1
        // Predicated region
        $region13: #{tpu_custom_call.1} parent=11 // pred_check
          %p122 = pneg %p60
        $region14: #{tpu_custom_call.1} parent=11 // pred_check_branch
          %124 = sbr.rel (%p122) target = $region16
        $region15: #{tpu_custom_call.1} parent=11 // pred_region
          %126 = vsyncadd [#allocation6], 0
          %s127 = sshll.u32 %s1, 4
          %s128 = int_to_ptr.hbm [resolvable:$true] %s127
          %s129 = sshll.u32 [#allocation5], 4
          %s130 = int_to_ptr.vmem [resolvable:$true] %s129
          %135 = dma.hbm_to_vmem [thread:$0]  %s128, 384, %s130, [#allocation6], 64, 64, 4
        $region16: #{tpu_custom_call.1} parent=11 // pred_fallthru
          _
        // Predicated region
        $region17: #{tpu_custom_call.1} parent=11 // pred_check
          %p136 = pneg %p81
        $region18: #{tpu_custom_call.1} parent=11 // pred_check_branch
          %138 = sbr.rel (%p136) target = $region20
        $region19: #{tpu_custom_call.1} parent=11 // pred_region
          %140 = vsyncadd [#allocation6], 0
          %s141 = sshll.u32 %s2, 4
          %s142 = int_to_ptr.hbm [resolvable:$true] %s141
          %s143 = sshll.u32 [#allocation7], 4
          %s144 = int_to_ptr.vmem [resolvable:$true] %s143
          %149 = dma.hbm_to_vmem [thread:$0]  %s142, 192, %s144, [#allocation6], 64, 64, 4
        $region20: #{tpu_custom_call.1} parent=11 // pred_fallthru
          _
      $region12: #{tpu_custom_call.1} parent=5 // pred_fallthru
        _
      %p150 = scmp.lt.s32.totalorder %s13, 2
      // Predicated region
      $region21: #{tpu_custom_call.1} parent=5 // pred_check
        %p151 = pneg %p150
      $region22: #{tpu_custom_call.1} parent=5 // pred_check_branch
        %153 = sbr.rel (%p151) target = $region24
      $region23: #{tpu_custom_call.1} parent=5 // pred_region
        // Predicated region
        $region25: #{tpu_custom_call.1} parent=23 // pred_check
          %p154 = pneg %p33
        $region26: #{tpu_custom_call.1} parent=23 // pred_check_branch
          %156 = sbr.rel (%p154) target = $region28
        $region27: #{tpu_custom_call.1} parent=23 // pred_region
          %s157 = sand.u32 %s23, 1
          %s158 = scalar_lea.sflag [#allocation4], %s157
          %s159 = sand.u32 %s23, 1
          %s160 = smul.addr %s159, 8
          %s161 = scalar_lea.vmem [#allocation3], %s160
          %163 = vsyncadd %s158, 0
          %s164 = smul.addr %s13, 2
          %s165 = smul.addr %s164, 4
          %s166 = scalar_lea.hbm %s0, %s165
          %s167 = sshll.u32 %s166, 4
          %s168 = int_to_ptr.hbm [resolvable:$true] %s167
          %s169 = sshll.u32 %s161, 4
          %s170 = int_to_ptr.vmem [resolvable:$true] %s169
          %175 = dma.hbm_to_vmem [thread:$0]  %s168, 128, %s170, %s158, 64, 64, 4
        $region28: #{tpu_custom_call.1} parent=23 // pred_fallthru
          _
      $region24: #{tpu_custom_call.1} parent=5 // pred_fallthru
        _
      %p176 = scmp.le.s32.totalorder 1, %s13
      %p177 = scmp.lt.s32.totalorder %s13, 3
      %p178 = pnand %p176, %p177
      %p179 = pneg %p178
      // Predicated region
      $region29: #{tpu_custom_call.1} parent=5 // pred_check
        _
      $region30: #{tpu_custom_call.1} parent=5 // pred_check_branch
        %181 = sbr.rel (%p178) target = $region32
      $region31: #{tpu_custom_call.1} parent=5 // pred_region
        %s182 = ssub.s32 %s13, 1
        %s183 = sand.u32 %s26, 1
        %s184 = scalar_lea.sflag [#allocation4], %s183
        %s185 = sand.u32 %s26, 1
        %s186 = smul.addr %s185, 8
        %s187 = scalar_lea.vmem [#allocation3], %s186
        // Predicated region
        $region33: #{tpu_custom_call.1} parent=31 // pred_check
          %p188 = pneg %p39
        $region34: #{tpu_custom_call.1} parent=31 // pred_check_branch
          %190 = sbr.rel (%p188) target = $region36
        $region35: #{tpu_custom_call.1} parent=31 // pred_region
          %192 = dma.done %s184, 128
        $region36: #{tpu_custom_call.1} parent=31 // pred_fallthru
          _
        // Predicated region
        $region37: #{tpu_custom_call.1} parent=31 // pred_check
          %p193 = pneg %p60
        $region38: #{tpu_custom_call.1} parent=31 // pred_check_branch
          %195 = sbr.rel (%p193) target = $region40
        $region39: #{tpu_custom_call.1} parent=31 // pred_region
          %197 = dma.done [#allocation6], 384
        $region40: #{tpu_custom_call.1} parent=31 // pred_fallthru
          _
        // Predicated region
        $region41: #{tpu_custom_call.1} parent=31 // pred_check
          %p198 = pneg %p81
        $region42: #{tpu_custom_call.1} parent=31 // pred_check_branch
          %200 = sbr.rel (%p198) target = $region44
        $region43: #{tpu_custom_call.1} parent=31 // pred_region
          %202 = dma.done [#allocation6], 192
        $region44: #{tpu_custom_call.1} parent=31 // pred_fallthru
          _
        %s203 = sand.u32 %s26, 1
        %s204 = scalar_lea.sflag [#allocation4], %s203
        %s205 = sand.u32 %s26, 1
        %s206 = smul.addr %s205, 8
        %s207 = scalar_lea.vmem [#allocation3], %s206
        %p208 = pneg %p39
        %p209 = pneg %p36
        %p210 = pneg %p60
        %p211 = pneg %p57
        %p212 = pneg %p81
        %p213 = pneg %p78
        %p214 = pneg %p107
        %p215 = pneg %p104
        %p216 = scmp.lt.s32.totalorder %s18, 1
        %s217 = scalar_select %p216, %s18, 1
        %s218 = smul.addr %s217, 3
        %s219 = smul.addr %s218, 4
        %s220 = scalar_lea.vmem %s3, %s219
        %p221 = scmp.lt.s32.totalorder %s18, 1
        %s222 = scalar_select %p221, %s18, 1
        %s223 = smul.addr %s222, 3
        %s224 = smul.addr %s223, 4
        %s225 = scalar_lea.vmem %s3, %s224
        %227 = vst [vmem:[#allocation2] sm:$0x1] 0.0
        %v228 = vld [vmem:[%s187] sm:$0xf]
        %v229 = vld [vmem:[%s187 + $0x4] sm:$0xf]
        %v230 = vld [vmem:[#allocation5] sm:$0xf]
        %v231 = vld [vmem:[#allocation5 + $0x4] sm:$0xf]
        %v232 = vld [vmem:[#allocation5 + $0x8] sm:$0xf]
        %v233 = vld [vmem:[#allocation5 + $0xc] sm:$0xf]
        %v234 = vld [vmem:[#allocation5 + $0x10] sm:$0xf]
        %v235 = vld [vmem:[#allocation5 + $0x14] sm:$0xf]
        %v238 = vunpack.c.l.b16 %v228
        %v239 = vunpack.c.l.b16 %v229
        %v240 = vpack.c.b16 %v239, %v238
        %v247 = vunpack.c.l.b16 %v230
        %v248 = vunpack.c.l.b16 %v231
        %v249 = vunpack.c.l.b16 %v232
        %v250 = vunpack.c.l.b16 %v233
        %v251 = vunpack.c.l.b16 %v234
        %v252 = vunpack.c.l.b16 %v235
        %v253 = vpack.c.b16 %v248, %v247
        %v254 = vpack.c.b16 %v250, %v249
        %v255 = vpack.c.b16 %v252, %v251
        %vm259 = vcmask 392192
        %v261 = vsel %vm259, %v240, 0
        %263 = vmatpush.bf16.msra.mxu0 0
        %264 = vmatpush.bf16.msra.mxu0 0
        %265 = vmatpush.bf16.msra.mxu0 0
        %266 = vmatpush.bf16.msra.mxu0 0
        %267 = vmatpush.bf16.msra.mxu0 0
        %268 = vmatpush.bf16.msra.mxu0 %v255
        %269 = vmatpush.bf16.msra.mxu0 %v254
        %270 = vmatpush.bf16.msra.mxu0 %v253
        %271 = vmatmul.bf16.gmra.mxu0 %v261
        %v272 = vpop.f32.mrf.mxu0
        %v273 = vadd.f32 0.0, %v272
        %v274 = vpop.f32.mrf.mxu0
        %v275 = vadd.f32 0.0, %v274
        %276 = vdwg.mxu0
        %277 = vst [vmem:[#allocation2 + $0x1] sm:$0xff] %v273
        %278 = vst [vmem:[#allocation2 + $0x9] sm:$0xff] %v275
        %v279 = vld [vmem:[#allocation2] sm:$0xff]
        %v280 = vld [vmem:[#allocation2 + $0x8] sm:$0xff]
        %v281 = vld [vmem:[#allocation2 + $0x10] sm:$0x1]
        %v282 = vld [vmem:[#allocation7] sm:$0xf]
        %v283 = vld [vmem:[#allocation7 + $0x4] sm:$0xf]
        %v284 = vld [vmem:[#allocation7 + $0x8] sm:$0x1]
        %v285 = vunpack.c.l.bf16 %v282
        %v286 = vunpack.c.l.bf16 %v283
        %v287 = vunpack.c.l.bf16 %v284
        %v288 = vadd.f32 %v279, %v285
        %v289 = vadd.f32 %v280, %v286
        %v290 = vadd.f32 %v281, %v287
        %v291 = vpack.c.bf16 %v288, %v288
        %v292 = vpack.c.bf16 %v289, %v289
        %v293 = vpack.c.bf16 %v290, %v290
        %294 = vst [vmem:[%s225] sm:$0xf] %v291
        %295 = vst [vmem:[%s225 + $0x4] sm:$0xf] %v292
        %vm296 = vcmask 1040384
        %vm297 = vsmask.f32 256
        %vm298 = vmand %vm296, %vm297
        %v299 = vld [vmem:[%s225 + $0x8] sm:$0x1]
        %v300 = vsel %vm298, %v293, %v299
        %301 = vst [vmem:[%s225 + $0x8] sm:$0x1] %v300
        %p302 = scmp.lt.s32.totalorder %s18, 1
        %s303 = scalar_select %p302, %s18, 1
        %s304 = smul.addr %s303, 3
        %s305 = smul.addr %s304, 4
        %s306 = scalar_lea.vmem %s3, %s305
        // Predicated region
        $region45: #{tpu_custom_call.1} parent=31 // pred_check
          %p307 = pneg %p104
        $region46: #{tpu_custom_call.1} parent=31 // pred_check_branch
          %309 = sbr.rel (%p307) target = $region48
        $region47: #{tpu_custom_call.1} parent=31 // pred_region
          _
        $region48: #{tpu_custom_call.1} parent=31 // pred_fallthru
          _
      $region32: #{tpu_custom_call.1} parent=5 // pred_fallthru
        _
      %p310 = scmp.le.s32.totalorder 2, %s13
      // Predicated region
      $region49: #{tpu_custom_call.1} parent=5 // pred_check
        %p311 = pneg %p310
      $region50: #{tpu_custom_call.1} parent=5 // pred_check_branch
        %313 = sbr.rel (%p311) target = $region52
      $region51: #{tpu_custom_call.1} parent=5 // pred_region
        %s314 = ssub.s32 %s13, 2
        // Predicated region
        $region53: #{tpu_custom_call.1} parent=51 // pred_check
          %p315 = pneg %p110
        $region54: #{tpu_custom_call.1} parent=51 // pred_check_branch
          %317 = sbr.rel (%p315) target = $region56
        $region55: #{tpu_custom_call.1} parent=51 // pred_region
          %p318 = scmp.lt.s32.totalorder %s19, 1
          %s319 = scalar_select %p318, %s19, 1
          %s320 = smul.addr %s319, 3
          %s321 = smul.addr %s320, 4
          %s322 = scalar_lea.vmem %s3, %s321
        $region56: #{tpu_custom_call.1} parent=51 // pred_fallthru
          _
      $region52: #{tpu_custom_call.1} parent=5 // pred_fallthru
        _
    $region6: #{tpu_custom_call.1} parent=1 // loop_footer
      %s17 = sadd.s32 1, %s13
    $region7: #{tpu_custom_call.1} parent=1 // loop_footer_branch
      %12 = sbr.rel target = $region3
    $region8: #{tpu_custom_call.1} parent=1 // loop_exit
      _
    %323 = vsyncpa [#allocation4], 1
    %s324 = scalar_lea.sflag [#allocation4], 1
    %325 = vsyncpa %s324, 1
    %326 = vsyncpa [#allocation6], 1

</llo_original>
